<compile_context>
chip_gen: v7x
topology: tpu7x:2x2x1
jax: 0.10.0
libtpu: 0.0.40
codegen_flags: <defaults>
</compile_context>

<pallas_src>
import functools
import math

import numpy as np
import jax
import jax.numpy as jnp
from jax.experimental import pallas as pl
from jax.experimental.pallas import tpu as pltpu


# --------------------------------------------------------------------------- kernel

def _freq_l1_kernel(x_ref, t_ref, cws_ref, csg_ref, o_ref, *, g, h, wf, n_groups):
    """Per grid step: sum_j  |Re(rfft2(x_j - t_j))| + |Im(rfft2(x_j - t_j))|.

    x_ref/t_ref : (tm*h, W)        tm = g * n_groups images stacked along rows
    cws_ref     : (W, 2*Wf)  bf16  [cos | sin] one-sided W-axis DFT matrix
    csg_ref     : (2*g*h, g*h) bf16  [blkdiag_g(cos_H); blkdiag_g(sin_H)]
    o_ref       : (1, 8, 128) f32  per-step partial sum broadcast into a vreg tile
    """
    gh = g * h
    d = x_ref[...].astype(jnp.float32) - t_ref[...].astype(jnp.float32)
    d = d.astype(jnp.bfloat16)                                       # (tm*h, W)

    # One-sided W-axis DFT, cos & sin fused into a single MXU matmul:
    #   dws[:, :Wf] = d @ cos_W      dws[:, Wf:] = d @ sin_W
    dws = jnp.dot(d, cws_ref[...], preferred_element_type=jnp.float32)
    dws = dws.astype(jnp.bfloat16)                                   # (tm*h, 2*Wf)

    csg = csg_ref[...]                                               # (2*g*h, g*h)
    total = jnp.zeros((), jnp.float32)
    for j in range(n_groups):      # short static loop; each iter reduces to a scalar
        blk = dws[j * gh:(j + 1) * gh, :]                            # (g*h, 2*Wf)
        p = jnp.dot(csg, blk, preferred_element_type=jnp.float32)    # (2*g*h, 2*Wf)
        # p[:gh, :Wf]=Ch@R  p[:gh, Wf:]=Ch@S  p[gh:, :Wf]=Sh@R  p[gh:, Wf:]=Sh@S
        y_re = p[:gh, :wf] - p[gh:, wf:]        #  Re(rfft2(d))
        y_im = p[:gh, wf:] + p[gh:, :wf]        # -Im(rfft2(d))  (same magnitude)
        total = total + jnp.sum(jnp.abs(y_re)) + jnp.sum(jnp.abs(y_im))

    # Lane-dense, unmasked store of the per-step partial sum.
    o_ref[...] = jnp.full(o_ref.shape, total, dtype=o_ref.dtype)


# --------------------------------------------------------------------------- sizing

def _pick_tiling(m, h, w, itemsize):
    """Images per grid step (tm) and padded image count (m_pad >= m)."""
    budget = 2 * 1024 * 1024            # ~bytes of x per grid step (per input)
    per_img = max(1, h * w * itemsize)
    sub = 8 // math.gcd(h, 8)           # tm multiple-of constraint for (8, ...) legality

    # Divisors of m that give a layout-legal block ((tm*h)%8==0, or the full array).
    divs = [d for d in range(1, m + 1) if m % d == 0 and (d % sub == 0 or d == m)]
    fit = [d for d in divs if d * per_img <= budget and d * h <= 8192] or [min(divs)]
    multi = [d for d in fit if m // d >= 2]      # keep >=2 grid steps (v7x megacore)
    tm = max(multi) if multi else max(fit)

    if tm == m and m > 1 and tm * per_img > 8 * budget and sub < m:
        # Forced into one giant block (no legal smaller divisor): pad instead.
        tm = sub
        while 2 * tm * per_img <= budget and 2 * tm < m:
            tm *= 2
        return tm, -(-m // tm) * tm
    return tm, m


def _pick_group(tm, h):
    """Images per block-diagonal H-pass matmul (g), and groups per grid step."""
    g = 1
    for d in range(1, tm + 1):
        if tm % d == 0 and d * h <= 1024:    # contraction K = g*h, bound block-diag size
            g = d
    return g, tm // g


def _dft_matrices(h, w, g):
    wf = w // 2 + 1
    ang_w = 2.0 * np.pi * np.outer(np.arange(w), np.arange(wf)) / w
    cws = np.concatenate([np.cos(ang_w), np.sin(ang_w)], axis=1)           # (W, 2*Wf)
    ang_h = 2.0 * np.pi * np.outer(np.arange(h), np.arange(h)) / h
    eye = np.eye(g)
    csg = np.concatenate([np.kron(eye, np.cos(ang_h)),
                          np.kron(eye, np.sin(ang_h))], axis=0)            # (2*g*h, g*h)
    return (jnp.asarray(cws, dtype=jnp.bfloat16),
            jnp.asarray(csg, dtype=jnp.bfloat16))


# --------------------------------------------------------------------------- wrapper

def frequency_loss(x, target, loss_weight=1.0, reduction="mean"):
    """Pallas TPU implementation of FrequencyLoss.forward (NCHW inputs)."""
    # TODO(synk): reduction='none' (per-element loss tensor output) is not implemented;
    # the reference default 'mean' (and 'sum') are.
    if reduction not in ("mean", "sum"):
        raise NotImplementedError("reduction='%s' not supported" % reduction)

    b, c, h, w = x.shape
    wf = w // 2 + 1
    m = b * c

    tm, m_pad = _pick_tiling(m, h, w, np.dtype(x.dtype).itemsize)
    num_tiles = m_pad // tm
    g, n_groups = _pick_group(tm, h)
    cws, csg = _dft_matrices(h, w, g)

    xr = jnp.reshape(x, (m * h, w))
    tr = jnp.reshape(target, (m * h, w))
    if m_pad != m:   # rare: only when no legal tile divides m; zero rows contribute 0
        pad = ((0, (m_pad - m) * h), (0, 0))
        xr = jnp.pad(xr, pad)
        tr = jnp.pad(tr, pad)

    kernel = functools.partial(_freq_l1_kernel, g=g, h=h, wf=wf, n_groups=n_groups)
    partials = pl.pallas_call(
        kernel,
        grid=(num_tiles,),
        out_shape=jax.ShapeDtypeStruct((num_tiles, 8, 128), jnp.float32),
        in_specs=[
            pl.BlockSpec((tm * h, w), lambda i: (i, 0)),         # x tile
            pl.BlockSpec((tm * h, w), lambda i: (i, 0)),         # target tile
            pl.BlockSpec((w, 2 * wf), lambda i: (0, 0)),         # [cos|sin]_W  (resident)
            pl.BlockSpec((2 * g * h, g * h), lambda i: (0, 0)),  # blkdiag [cos;sin]_H (resident)
        ],
        out_specs=pl.BlockSpec((1, 8, 128), lambda i: (i, 0, 0)),
        compiler_params=pltpu.CompilerParams(
            dimension_semantics=("parallel",),
            vmem_limit_bytes=48 * 1024 * 1024),
    )(xr, tr, cws, csg)

    total = jnp.sum(partials) * (1.0 / (8 * 128))   # every lane holds the per-step sum
    if reduction == "mean":
        total = total / (m * h * wf * 2)            # real+imag element count (unpadded)
    return (loss_weight * total).astype(jnp.float32)


# --------------------------------------------------------------------------- demo

if __name__ == "__main__":
    key = jax.random.PRNGKey(0)
    kx, kt = jax.random.split(key)
    B, C, H, W = 2, 3, 16, 16
    x = jax.random.normal(kx, (B, C, H, W), jnp.float32)
    target = jax.random.normal(kt, (B, C, H, W), jnp.float32)
    loss_weight = 1.0

    loss = jax.block_until_ready(frequency_loss(x, target, loss_weight))

    # Host float64 reference (same math as the PyTorch module).
    xf = np.fft.rfft2(np.asarray(x, dtype=np.float64))
    tf = np.fft.rfft2(np.asarray(target, dtype=np.float64))
    diff = xf - tf
    ref = loss_weight * (np.abs(diff.real).sum() + np.abs(diff.imag).sum()) / (2 * diff.size)

    val = float(loss)
    assert np.isfinite(val)
    rel = abs(val - ref) / max(1e-6, abs(ref))
    assert rel < 2e-2, (val, ref, rel)
    print("KERNEL_OK")
</pallas_src>

<mosaic_0001>
module attributes {stable_mosaic.version = 11 : i64} {
  func.func @_freq_l1_kernel(%arg0: i32, %arg1: memref<48x16xf32, #tpu.memory_space<vmem>>, %arg2: memref<48x16xf32, #tpu.memory_space<vmem>>, %arg3: memref<16x18xbf16, #tpu.memory_space<vmem>>, %arg4: memref<96x48xbf16, #tpu.memory_space<vmem>>, %arg5: memref<1x8x128xf32, #tpu.memory_space<vmem>>) attributes {dimension_semantics = [#tpu.dimension_semantics<parallel>], iteration_bounds = array<i64: 2>, scalar_prefetch = 0 : i64, scratch_operands = 0 : i64, tpu.core_type = #tpu.core_type<tc>, window_params = [{transform_indices = @transform_0, window_bounds = array<i64: 48, 16>}, {transform_indices = @transform_1, window_bounds = array<i64: 48, 16>}, {pipeline_mode = #tpu.pipeline_mode<synchronous>, transform_indices = @transform_2, window_bounds = array<i64: 16, 18>}, {pipeline_mode = #tpu.pipeline_mode<synchronous>, transform_indices = @transform_3, window_bounds = array<i64: 96, 48>}, {transform_indices = @transform_4, window_bounds = array<i64: 1, 8, 128>}]} {
    %c0 = arith.constant 0 : index
    %c0_0 = arith.constant 0 : index
    %0 = vector.load %arg1[%c0, %c0_0] : memref<48x16xf32, #tpu.memory_space<vmem>>, vector<48x16xf32>
    %c0_1 = arith.constant 0 : index
    %c0_2 = arith.constant 0 : index
    %1 = vector.load %arg2[%c0_1, %c0_2] : memref<48x16xf32, #tpu.memory_space<vmem>>, vector<48x16xf32>
    %2 = arith.subf %0, %1 : vector<48x16xf32>
    %3 = arith.truncf %2 : vector<48x16xf32> to vector<48x16xbf16>
    %c0_3 = arith.constant 0 : index
    %c0_4 = arith.constant 0 : index
    %4 = vector.load %arg3[%c0_3, %c0_4] : memref<16x18xbf16, #tpu.memory_space<vmem>>, vector<16x18xbf16>
    %cst = arith.constant dense<0.000000e+00> : vector<48x18xf32>
    %5 = tpu.matmul %3, %4, %cst {dimension_numbers = #tpu.dot_dimension_numbers<[1], [0], [0], [1], [0, 0, 1, 1], [], []>} : vector<48x16xbf16>, vector<16x18xbf16>, vector<48x18xf32> -> vector<48x18xf32>
    %6 = arith.truncf %5 : vector<48x18xf32> to vector<48x18xbf16>
    %c0_5 = arith.constant 0 : index
    %c0_6 = arith.constant 0 : index
    %7 = vector.load %arg4[%c0_5, %c0_6] : memref<96x48xbf16, #tpu.memory_space<vmem>>, vector<96x48xbf16>
    %cst_7 = arith.constant dense<0.000000e+00> : vector<96x18xf32>
    %8 = tpu.matmul %7, %6, %cst_7 {dimension_numbers = #tpu.dot_dimension_numbers<[1], [0], [0], [1], [0, 0, 1, 1], [], []>} : vector<96x48xbf16>, vector<48x18xbf16>, vector<96x18xf32> -> vector<96x18xf32>
    %9 = vector.extract_strided_slice %8 {offsets = [0, 0], sizes = [48, 9], strides = [1, 1]} : vector<96x18xf32> to vector<48x9xf32>
    %10 = vector.extract_strided_slice %8 {offsets = [48, 9], sizes = [48, 9], strides = [1, 1]} : vector<96x18xf32> to vector<48x9xf32>
    %11 = arith.subf %9, %10 : vector<48x9xf32>
    %12 = vector.extract_strided_slice %8 {offsets = [0, 9], sizes = [48, 9], strides = [1, 1]} : vector<96x18xf32> to vector<48x9xf32>
    %13 = vector.extract_strided_slice %8 {offsets = [48, 0], sizes = [48, 9], strides = [1, 1]} : vector<96x18xf32> to vector<48x9xf32>
    %14 = arith.addf %12, %13 : vector<48x9xf32>
    %15 = math.absf %11 : vector<48x9xf32>
    %16 = vector.shape_cast %15 : vector<48x9xf32> to vector<1x48x9xf32>
    %cst_8 = arith.constant dense<0.000000e+00> : vector<1xf32>
    %17 = vector.multi_reduction <add>, %16, %cst_8 [1, 2] : vector<1x48x9xf32> to vector<1xf32>
    %18 = vector.shape_cast %17 : vector<1xf32> to vector<1x1x1xf32>
    %19 = vector.extract %18[0, 0, 0] : f32 from vector<1x1x1xf32>
    %cst_9 = arith.constant 0.000000e+00 : f32
    %20 = arith.addf %cst_9, %19 : f32
    %21 = math.absf %14 : vector<48x9xf32>
    %22 = vector.shape_cast %21 : vector<48x9xf32> to vector<1x48x9xf32>
    %cst_10 = arith.constant dense<0.000000e+00> : vector<1xf32>
    %23 = vector.multi_reduction <add>, %22, %cst_10 [1, 2] : vector<1x48x9xf32> to vector<1xf32>
    %24 = vector.shape_cast %23 : vector<1xf32> to vector<1x1x1xf32>
    %25 = vector.extract %24[0, 0, 0] : f32 from vector<1x1x1xf32>
    %26 = arith.addf %20, %25 : f32
    %27 = vector.broadcast %26 : f32 to vector<1x8x128xf32>
    %c0_11 = arith.constant 0 : index
    %c0_12 = arith.constant 0 : index
    %c0_13 = arith.constant 0 : index
    %28 = vector.load %arg5[%c0_11, %c0_12, %c0_13] : memref<1x8x128xf32, #tpu.memory_space<vmem>>, vector<1x8x128xf32>
    tpu.vector_store %arg5[%c0_11, %c0_12, %c0_13], %27 {strides = array<i32>} : memref<1x8x128xf32, #tpu.memory_space<vmem>>, vector<1x8x128xf32>,
    return
  }
  func.func @transform_0(%arg0: i32) -> (i32, i32) {
    %c0_i32 = arith.constant 0 : i32
    %c0_i32_0 = arith.constant 0 : i32
    return %arg0, %c0_i32 : i32, i32
  }
  func.func @transform_1(%arg0: i32) -> (i32, i32) {
    %c0_i32 = arith.constant 0 : i32
    %c0_i32_0 = arith.constant 0 : i32
    return %arg0, %c0_i32 : i32, i32
  }
  func.func @transform_2(%arg0: i32) -> (i32, i32) {
    %c0_i32 = arith.constant 0 : i32
    %c0_i32_0 = arith.constant 0 : i32
    %c0_i32_1 = arith.constant 0 : i32
    return %c0_i32, %c0_i32_0 : i32, i32
  }
  func.func @transform_3(%arg0: i32) -> (i32, i32) {
    %c0_i32 = arith.constant 0 : i32
    %c0_i32_0 = arith.constant 0 : i32
    %c0_i32_1 = arith.constant 0 : i32
    return %c0_i32, %c0_i32_0 : i32, i32
  }
  func.func @transform_4(%arg0: i32) -> (i32, i32, i32) {
    %c0_i32 = arith.constant 0 : i32
    %c0_i32_0 = arith.constant 0 : i32
    %c0_i32_1 = arith.constant 0 : i32
    return %arg0, %c0_i32, %c0_i32_0 : i32, i32, i32
  }
}

</mosaic_0001>

<llo_original>
// kernel: tpu_custom_call.1
$region0: #{tpu_custom_call.1}
  #allocation0 [shape = 'u32[]', space=smem, size = 0x4, offset = 0x4, fixed_abs, tag = 'smem constant byte address 0x4 - core index']
  #allocation1 [shape = 'u32[144,128]{1,0:T(1,128)}', space=vmem, size = 0x12000, scoped, tag = 'internal scratch']
  %s0 = inlined_call_operand.vmem [shape: f32[96,16], index: 0, kind: input, shape index: {}]
  %s1 = inlined_call_operand.vmem [shape: f32[96,16], index: 1, kind: input, shape index: {}]
  %s2 = inlined_call_operand.vmem [shape: bf16[16,18], index: 2, kind: input, shape index: {}]
  %s3 = inlined_call_operand.vmem [shape: bf16[96,48], index: 3, kind: input, shape index: {}]
  %s4 = inlined_call_operand.hbm [shape: f32[2,8,128], index: 4, kind: output, shape index: {}]
  %s5 = sld [smem:[#allocation0]]
  $region49: #{tpu_custom_call.1} parent=0
    _
  %s7 = ssub.s32 1, %s5
  %s8 = scalar_select 0, %s7, %s5
  $region1: #{tpu_custom_call.1} parent=0
    #allocation2 [shape = 'u8[8192]{0}', space=vmem, size = 0x2000, scoped, tag = 'output window, operand 0']
    #allocation3 [shape = 's32[2]{0}', space=sflag, size = 0x8, scoped, tag = 'scoped memory for tpu_custom_call.1']
    %9 = vsyncpa [#allocation3], 0
    %s10 = scalar_lea.sflag [#allocation3], 1
    %11 = vsyncpa %s10, 0
    loop: start=0, step=1, limit=4
    $region2: #{tpu_custom_call.1} parent=1 // loop_pre_header
      _
    $region3: #{tpu_custom_call.1} parent=1 // loop_header
      %s13 = sphi 0, %s17
      %p14 = scmp.ge.s32.totalorder %s13, 4
      %s23 = sphi 0, %s25
      %s26 = sphi 0, %s23
      %s27 = sphi 0, %s26
      %s43 = sphi 0, %s27
      %s49 = sphi 0, %s51
      %s52 = sphi 0, %s49
      %s53 = sphi 0, %s52
      %s69 = sphi 0, %s53
      %s73 = sphi 0, %s73
      %s75 = sphi 0, %s73
      %s76 = sphi 0, %s75
      %s90 = sphi 0, %s76
      %s94 = sphi 0, %s94
      %s96 = sphi 0, %s94
      %s97 = sphi 0, %s96
      %s111 = sphi 0, %s97
      %s117 = sphi 0, %s119
      %s120 = sphi 0, %s117
      %s121 = sphi 0, %s120
      %s137 = sphi 0, %s121
    $region4: #{tpu_custom_call.1} parent=1 // loop_header_branch
      %16 = sbr.rel (%p14) target = $region8
    $region5: #{tpu_custom_call.1} parent=1 // loop_body
      %s18 = ssub.s32 %s13, 1
      %s19 = ssub.s32 %s13, 2
      %s20 = sadd.s32 %s13, 1
      %s21 = ssub.s32 %s13, %s20
      %p22 = scmp.eq.s32.totalorder %s21, 0
      %s24 = sadd.s32 %s23, 1
      %s25 = scalar_select %p22, %s23, %s24
      %p28 = pneg %p22
      %p29 = scmp.eq.s32.totalorder %s13, 1
      %p30 = por %p28, %p29
      %p31 = scmp.ne.s32.totalorder %s23, %s26
      %p32 = scmp.eq.s32.totalorder %s13, 0
      %p33 = por %p31, %p32
      %p34 = scmp.ne.s32.totalorder %s23, %s26
      %p35 = scmp.eq.s32.totalorder %s18, 1
      %p36 = por %p34, %p35
      %p37 = scmp.ne.s32.totalorder %s26, %s27
      %p38 = scmp.eq.s32.totalorder %s18, 0
      %p39 = por %p37, %p38
      %p40 = scmp.ne.s32.totalorder %s26, %s27
      %p41 = scmp.eq.s32.totalorder %s19, 1
      %p42 = por %p40, %p41
      %p44 = scmp.ne.s32.totalorder %s27, %s43
      %p45 = scmp.eq.s32.totalorder %s19, 0
      %p46 = por %p44, %p45
      %s47 = ssub.s32 %s13, %s20
      %p48 = scmp.eq.s32.totalorder %s47, 0
      %s50 = sadd.s32 %s49, 1
      %s51 = scalar_select %p48, %s49, %s50
      %p54 = pneg %p48
      %p55 = scmp.eq.s32.totalorder %s13, 1
      %p56 = por %p54, %p55
      %p57 = scmp.ne.s32.totalorder %s49, %s52
      %p58 = scmp.eq.s32.totalorder %s13, 0
      %p59 = por %p57, %p58
      %p60 = scmp.ne.s32.totalorder %s49, %s52
      %p61 = scmp.eq.s32.totalorder %s18, 1
      %p62 = por %p60, %p61
      %p63 = scmp.ne.s32.totalorder %s52, %s53
      %p64 = scmp.eq.s32.totalorder %s18, 0
      %p65 = por %p63, %p64
      %p66 = scmp.ne.s32.totalorder %s52, %s53
      %p67 = scmp.eq.s32.totalorder %s19, 1
      %p68 = por %p66, %p67
      %p70 = scmp.ne.s32.totalorder %s53, %s69
      %p71 = scmp.eq.s32.totalorder %s19, 0
      %p72 = por %p70, %p71
      %s74 = sadd.s32 %s73, 1
      %p77 = scmp.eq.s32.totalorder %s13, 1
      %p78 = scmp.ne.s32.totalorder %s73, %s75
      %p79 = scmp.eq.s32.totalorder %s13, 0
      %p80 = por %p78, %p79
      %p81 = scmp.ne.s32.totalorder %s73, %s75
      %p82 = scmp.eq.s32.totalorder %s18, 1
      %p83 = por %p81, %p82
      %p84 = scmp.ne.s32.totalorder %s75, %s76
      %p85 = scmp.eq.s32.totalorder %s18, 0
      %p86 = por %p84, %p85
      %p87 = scmp.ne.s32.totalorder %s75, %s76
      %p88 = scmp.eq.s32.totalorder %s19, 1
      %p89 = por %p87, %p88
      %p91 = scmp.ne.s32.totalorder %s76, %s90
      %p92 = scmp.eq.s32.totalorder %s19, 0
      %p93 = por %p91, %p92
      %s95 = sadd.s32 %s94, 1
      %p98 = scmp.eq.s32.totalorder %s13, 1
      %p99 = scmp.ne.s32.totalorder %s94, %s96
      %p100 = scmp.eq.s32.totalorder %s13, 0
      %p101 = por %p99, %p100
      %p102 = scmp.ne.s32.totalorder %s94, %s96
      %p103 = scmp.eq.s32.totalorder %s18, 1
      %p104 = por %p102, %p103
      %p105 = scmp.ne.s32.totalorder %s96, %s97
      %p106 = scmp.eq.s32.totalorder %s18, 0
      %p107 = por %p105, %p106
      %p108 = scmp.ne.s32.totalorder %s96, %s97
      %p109 = scmp.eq.s32.totalorder %s19, 1
      %p110 = por %p108, %p109
      %p112 = scmp.ne.s32.totalorder %s97, %s111
      %p113 = scmp.eq.s32.totalorder %s19, 0
      %p114 = por %p112, %p113
      %s115 = ssub.s32 %s13, %s20
      %p116 = scmp.eq.s32.totalorder %s115, 0
      %s118 = sadd.s32 %s117, 1
      %s119 = scalar_select %p116, %s117, %s118
      %p122 = pneg %p116
      %p123 = scmp.eq.s32.totalorder %s13, 1
      %p124 = por %p122, %p123
      %p125 = scmp.ne.s32.totalorder %s117, %s120
      %p126 = scmp.eq.s32.totalorder %s13, 0
      %p127 = por %p125, %p126
      %p128 = scmp.ne.s32.totalorder %s117, %s120
      %p129 = scmp.eq.s32.totalorder %s18, 1
      %p130 = por %p128, %p129
      %p131 = scmp.ne.s32.totalorder %s120, %s121
      %p132 = scmp.eq.s32.totalorder %s18, 0
      %p133 = por %p131, %p132
      %p134 = scmp.ne.s32.totalorder %s120, %s121
      %p135 = scmp.eq.s32.totalorder %s19, 1
      %p136 = por %p134, %p135
      %p138 = scmp.ne.s32.totalorder %s121, %s137
      %p139 = scmp.eq.s32.totalorder %s19, 0
      %p140 = por %p138, %p139
      %p141 = scmp.le.s32.totalorder 1, %s13
      %p142 = scmp.lt.s32.totalorder %s13, 3
      %p143 = pnand %p141, %p142
      %p144 = pneg %p143
      // Predicated region
      $region9: #{tpu_custom_call.1} parent=5 // pred_check
        _
      $region10: #{tpu_custom_call.1} parent=5 // pred_check_branch
        %146 = sbr.rel (%p143) target = $region12
      $region11: #{tpu_custom_call.1} parent=5 // pred_region
        %s147 = ssub.s32 %s13, 1
        // Predicated region
        $region13: #{tpu_custom_call.1} parent=11 // pred_check
          %p148 = pneg %p86
        $region14: #{tpu_custom_call.1} parent=11 // pred_check_branch
          %150 = sbr.rel (%p148) target = $region16
        $region15: #{tpu_custom_call.1} parent=11 // pred_region
          _
        $region16: #{tpu_custom_call.1} parent=11 // pred_fallthru
          _
        // Predicated region
        $region17: #{tpu_custom_call.1} parent=11 // pred_check
          %p151 = pneg %p107
        $region18: #{tpu_custom_call.1} parent=11 // pred_check_branch
          %153 = sbr.rel (%p151) target = $region20
        $region19: #{tpu_custom_call.1} parent=11 // pred_region
          _
        $region20: #{tpu_custom_call.1} parent=11 // pred_fallthru
          _
      $region12: #{tpu_custom_call.1} parent=5 // pred_fallthru
        _
      %p154 = scmp.lt.s32.totalorder %s13, 2
      // Predicated region
      $region21: #{tpu_custom_call.1} parent=5 // pred_check
        %p155 = pneg %p154
      $region22: #{tpu_custom_call.1} parent=5 // pred_check_branch
        %157 = sbr.rel (%p155) target = $region24
      $region23: #{tpu_custom_call.1} parent=5 // pred_region
        // Predicated region
        $region25: #{tpu_custom_call.1} parent=23 // pred_check
          %p158 = pneg %p33
        $region26: #{tpu_custom_call.1} parent=23 // pred_check_branch
          %160 = sbr.rel (%p158) target = $region28
        $region27: #{tpu_custom_call.1} parent=23 // pred_region
          %s161 = smul.u32 6, %s13
          %p162 = scmp.lt.s32.totalorder %s161, 11
          %s163 = scalar_select %p162, %s161, 11
          %s164 = smul.addr %s163, 8
          %s165 = scalar_lea.vmem %s0, %s164
          %s166 = smul.u32 6, %s13
        $region28: #{tpu_custom_call.1} parent=23 // pred_fallthru
          _
        // Predicated region
        $region29: #{tpu_custom_call.1} parent=23 // pred_check
          %p167 = pneg %p59
        $region30: #{tpu_custom_call.1} parent=23 // pred_check_branch
          %169 = sbr.rel (%p167) target = $region32
        $region31: #{tpu_custom_call.1} parent=23 // pred_region
          %s170 = smul.u32 6, %s13
          %p171 = scmp.lt.s32.totalorder %s170, 11
          %s172 = scalar_select %p171, %s170, 11
          %s173 = smul.addr %s172, 8
          %s174 = scalar_lea.vmem %s1, %s173
          %s175 = smul.u32 6, %s13
        $region32: #{tpu_custom_call.1} parent=23 // pred_fallthru
          _
      $region24: #{tpu_custom_call.1} parent=5 // pred_fallthru
        _
      %p176 = scmp.le.s32.totalorder 1, %s13
      %p177 = scmp.lt.s32.totalorder %s13, 3
      %p178 = pnand %p176, %p177
      %p179 = pneg %p178
      // Predicated region
      $region33: #{tpu_custom_call.1} parent=5 // pred_check
        _
      $region34: #{tpu_custom_call.1} parent=5 // pred_check_branch
        %181 = sbr.rel (%p178) target = $region36
      $region35: #{tpu_custom_call.1} parent=5 // pred_region
        %s182 = ssub.s32 %s13, 1
        %s183 = smul.u32 6, %s18
        %p184 = scmp.lt.s32.totalorder %s183, 11
        %s185 = scalar_select %p184, %s183, 11
        %s186 = smul.addr %s185, 8
        %s187 = scalar_lea.vmem %s0, %s186
        %p188 = pneg %p39
        %p189 = pneg %p36
        %s190 = smul.u32 6, %s18
        %p191 = scmp.lt.s32.totalorder %s190, 11
        %s192 = scalar_select %p191, %s190, 11
        %s193 = smul.addr %s192, 8
        %s194 = scalar_lea.vmem %s1, %s193
        %p195 = pneg %p65
        %p196 = pneg %p62
        %p197 = pneg %p86
        %p198 = pneg %p83
        %p199 = pneg %p107
        %p200 = pneg %p104
        %p201 = pneg %p133
        %p202 = pneg %p130
        %s203 = sand.u32 %s120, 1
        %s204 = scalar_lea.sflag [#allocation3], %s203
        %s205 = sand.u32 %s120, 1
        %s206 = smul.addr %s205, 8
        %s207 = scalar_lea.vmem [#allocation2], %s206
        %s208 = smul.u32 6, %s18
        %p209 = scmp.lt.s32.totalorder %s208, 11
        %s210 = scalar_select %p209, %s208, 11
        %s211 = smul.addr %s210, 8
        %s212 = scalar_lea.vmem %s0, %s211
        %s213 = smul.u32 6, %s18
        %s214 = smul.u32 6, %s18
        %p215 = scmp.lt.s32.totalorder %s214, 11
        %s216 = scalar_select %p215, %s214, 11
        %s217 = smul.addr %s216, 8
        %s218 = scalar_lea.vmem %s1, %s217
        %s219 = smul.u32 6, %s18
        %v221 = vld [vmem:[%s212] sm:$0xff]
        %v222 = vld [vmem:[%s212 + $0x8] sm:$0xff]
        %v223 = vld [vmem:[%s212 + $0x10] sm:$0xff]
        %v224 = vld [vmem:[%s212 + $0x18] sm:$0xff]
        %v225 = vld [vmem:[%s212 + $0x20] sm:$0xff]
        %v226 = vld [vmem:[%s212 + $0x28] sm:$0xff]
        %v227 = vld [vmem:[%s218] sm:$0xff]
        %v228 = vld [vmem:[%s218 + $0x8] sm:$0xff]
        %v229 = vld [vmem:[%s218 + $0x10] sm:$0xff]
        %v230 = vld [vmem:[%s218 + $0x18] sm:$0xff]
        %v231 = vld [vmem:[%s218 + $0x20] sm:$0xff]
        %v232 = vld [vmem:[%s218 + $0x28] sm:$0xff]
        %v233 = vsub.f32 %v221, %v227
        %v234 = vsub.f32 %v222, %v228
        %v235 = vsub.f32 %v223, %v229
        %v236 = vsub.f32 %v224, %v230
        %v237 = vsub.f32 %v225, %v231
        %v238 = vsub.f32 %v226, %v232
        %v239 = vpack.c.bf16 %v234, %v233
        %v240 = vpack.c.bf16 %v236, %v235
        %v241 = vpack.c.bf16 %v238, %v237
        %v242 = vld [vmem:[%s2] sm:$0xf]
        %v243 = vld [vmem:[%s2 + $0x4] sm:$0xf]
        %v246 = vunpack.c.l.b16 %v242
        %v247 = vunpack.c.l.b16 %v243
        %v248 = vpack.c.b16 %v247, %v246
        %vm250 = vcmask 130048
        %v252 = vsel %vm250, %v239, 0
        %v255 = vsel %vm250, %v240, 0
        %v258 = vsel %vm250, %v241, 0
        %260 = vmatprep.subr.bf16.mxu0 0
        %261 = vmatpush1.bf16.msra.mxu0 %v248
        %262 = vmatprep.subr.bf16.mxu0 0
        %263 = vmatpush1.bf16.msra.mxu0 0
        %264 = vmatprep.subr.bf16.mxu0 0
        %265 = vmatpush1.bf16.msra.mxu0 0
        %266 = vmatprep.subr.bf16.mxu0 0
        %267 = vmatpush1.bf16.msra.mxu0 0
        %268 = vmatprep.subr.bf16.mxu0 0
        %269 = vmatpush1.bf16.msra.mxu0 0
        %270 = vmatprep.subr.bf16.mxu0 0
        %271 = vmatpush1.bf16.msra.mxu0 0
        %272 = vmatprep.subr.bf16.mxu0 0
        %273 = vmatpush1.bf16.msra.mxu0 0
        %274 = vmatprep.subr.bf16.mxu0 0
        %275 = vmatpush1.bf16.msra.mxu0 0
        %276 = vmatprep.subr.bf16.mxu0 0
        %277 = vmatpush1.bf16.msra.mxu0 0
        %278 = vmatprep.subr.bf16.mxu0 0
        %279 = vmatpush1.bf16.msra.mxu0 0
        %280 = vmatprep.subr.bf16.mxu0 0
        %281 = vmatpush1.bf16.msra.mxu0 0
        %282 = vmatprep.subr.bf16.mxu0 0
        %283 = vmatpush1.bf16.msra.mxu0 0
        %284 = vmatprep.subr.bf16.mxu0 0
        %285 = vmatpush1.bf16.msra.mxu0 0
        %286 = vmatprep.subr.bf16.mxu0 0
        %287 = vmatpush1.bf16.msra.mxu0 0
        %288 = vmatprep.subr.bf16.mxu0 0
        %289 = vmatpush1.bf16.msra.mxu0 0
        %290 = vmatprep.subr.bf16.mxu0 0
        %291 = vmatpush1.bf16.msra.mxu0 0
        %292 = vmatprep.mubr.bf16.mxu0 0
        %293 = vmatmul.mubr.bf16.gmra.mrb[0].mxu0 %v252
        %v294 = vpop.f32.mrb[0].mxu0
        %v295 = vadd.f32 0.0, %v294
        %v296 = vpop.f32.mrb[0].mxu0
        %v297 = vpop.f32.mrb[0].mxu0
        %v298 = vadd.f32 0.0, %v297
        %v299 = vpop.f32.mrb[0].mxu0
        %300 = vmatprep.mubr.bf16.mxu0 0
        %301 = vmatmul.mubr.bf16.gmra.mrb[0].mxu0 %v255
        %v302 = vpop.f32.mrb[0].mxu0
        %v303 = vadd.f32 0.0, %v302
        %v304 = vpop.f32.mrb[0].mxu0
        %v305 = vpop.f32.mrb[0].mxu0
        %v306 = vadd.f32 0.0, %v305
        %v307 = vpop.f32.mrb[0].mxu0
        %308 = vmatprep.mubr.bf16.mxu0 0
        %309 = vmatmul.mubr.bf16.gmra.mrb[0].mxu0 %v258
        %v310 = vpop.f32.mrb[0].mxu0
        %v311 = vadd.f32 0.0, %v310
        %v312 = vpop.f32.mrb[0].mxu0
        %v313 = vpop.f32.mrb[0].mxu0
        %v314 = vadd.f32 0.0, %v313
        %v315 = vpop.f32.mrb[0].mxu0
        %316 = vdwg.mxu0
        %v317 = vpack.c.bf16 %v298, %v295
        %v318 = vpack.c.bf16 %v306, %v303
        %v319 = vpack.c.bf16 %v314, %v311
        %v320 = vld [vmem:[%s3] sm:$0xf]
        %v321 = vld [vmem:[%s3 + $0x4] sm:$0xf]
        %v322 = vld [vmem:[%s3 + $0x8] sm:$0xf]
        %v323 = vld [vmem:[%s3 + $0xc] sm:$0xf]
        %v324 = vld [vmem:[%s3 + $0x10] sm:$0xf]
        %v325 = vld [vmem:[%s3 + $0x14] sm:$0xf]
        %v326 = vld [vmem:[%s3 + $0x18] sm:$0xf]
        %v327 = vld [vmem:[%s3 + $0x1c] sm:$0xf]
        %v328 = vld [vmem:[%s3 + $0x20] sm:$0xf]
        %v329 = vld [vmem:[%s3 + $0x24] sm:$0xf]
        %v330 = vld [vmem:[%s3 + $0x28] sm:$0xf]
        %v331 = vld [vmem:[%s3 + $0x2c] sm:$0xf]
        %v344 = vunpack.c.l.b16 %v320
        %v345 = vunpack.c.l.b16 %v321
        %v346 = vunpack.c.l.b16 %v322
        %v347 = vunpack.c.l.b16 %v323
        %v348 = vunpack.c.l.b16 %v324
        %v349 = vunpack.c.l.b16 %v325
        %v350 = vunpack.c.l.b16 %v326
        %v351 = vunpack.c.l.b16 %v327
        %v352 = vunpack.c.l.b16 %v328
        %v353 = vunpack.c.l.b16 %v329
        %v354 = vunpack.c.l.b16 %v330
        %v355 = vunpack.c.l.b16 %v331
        %v356 = vpack.c.b16 %v345, %v344
        %v357 = vpack.c.b16 %v347, %v346
        %v358 = vpack.c.b16 %v349, %v348
        %v359 = vpack.c.b16 %v351, %v350
        %v360 = vpack.c.b16 %v353, %v352
        %v361 = vpack.c.b16 %v355, %v354
        %vm362 = vcmask 392192
        %v364 = vsel %vm362, %v356, 0
        %v367 = vsel %vm362, %v357, 0
        %v370 = vsel %vm362, %v358, 0
        %v373 = vsel %vm362, %v359, 0
        %v376 = vsel %vm362, %v360, 0
        %v379 = vsel %vm362, %v361, 0
        %381 = vmatprep.subr.bf16.mxu0 0
        %382 = vmatpush1.bf16.msra.mxu0 %v317
        %383 = vmatprep.subr.bf16.mxu0 0
        %384 = vmatpush1.bf16.msra.mxu0 %v318
        %385 = vmatprep.subr.bf16.mxu0 0
        %386 = vmatpush1.bf16.msra.mxu0 %v319
        %387 = vmatprep.subr.bf16.mxu0 0
        %388 = vmatpush1.bf16.msra.mxu0 0
        %389 = vmatprep.subr.bf16.mxu0 0
        %390 = vmatpush1.bf16.msra.mxu0 0
        %391 = vmatprep.subr.bf16.mxu0 0
        %392 = vmatpush1.bf16.msra.mxu0 0
        %393 = vmatprep.subr.bf16.mxu0 0
        %394 = vmatpush1.bf16.msra.mxu0 0
        %395 = vmatprep.subr.bf16.mxu0 0
        %396 = vmatpush1.bf16.msra.mxu0 0
        %397 = vmatprep.subr.bf16.mxu0 0
        %398 = vmatpush1.bf16.msra.mxu0 0
        %399 = vmatprep.subr.bf16.mxu0 0
        %400 = vmatpush1.bf16.msra.mxu0 0
        %401 = vmatprep.subr.bf16.mxu0 0
        %402 = vmatpush1.bf16.msra.mxu0 0
        %403 = vmatprep.subr.bf16.mxu0 0
        %404 = vmatpush1.bf16.msra.mxu0 0
        %405 = vmatprep.subr.bf16.mxu0 0
        %406 = vmatpush1.bf16.msra.mxu0 0
        %407 = vmatprep.subr.bf16.mxu0 0
        %408 = vmatpush1.bf16.msra.mxu0 0
        %409 = vmatprep.subr.bf16.mxu0 0
        %410 = vmatpush1.bf16.msra.mxu0 0
        %411 = vmatprep.subr.bf16.mxu0 0
        %412 = vmatpush1.bf16.msra.mxu0 0
        %413 = vmatprep.mubr.bf16.mxu0 0
        %414 = vmatmul.mubr.bf16.gmra.mrb[0].mxu0 %v364
        %v415 = vpop.f32.mrb[0].mxu0
        %v416 = vadd.f32 0.0, %v415
        %v417 = vpop.f32.mrb[0].mxu0
        %v418 = vpop.f32.mrb[0].mxu0
        %v419 = vadd.f32 0.0, %v418
        %v420 = vpop.f32.mrb[0].mxu0
        %421 = vmatprep.mubr.bf16.mxu0 0
        %422 = vmatmul.mubr.bf16.gmra.mrb[0].mxu0 %v367
        %v423 = vpop.f32.mrb[0].mxu0
        %v424 = vadd.f32 0.0, %v423
        %v425 = vpop.f32.mrb[0].mxu0
        %v426 = vpop.f32.mrb[0].mxu0
        %v427 = vadd.f32 0.0, %v426
        %v428 = vpop.f32.mrb[0].mxu0
        %429 = vmatprep.mubr.bf16.mxu0 0
        %430 = vmatmul.mubr.bf16.gmra.mrb[0].mxu0 %v370
        %v431 = vpop.f32.mrb[0].mxu0
        %v432 = vadd.f32 0.0, %v431
        %v433 = vpop.f32.mrb[0].mxu0
        %v434 = vpop.f32.mrb[0].mxu0
        %v435 = vadd.f32 0.0, %v434
        %v436 = vpop.f32.mrb[0].mxu0
        %437 = vmatprep.mubr.bf16.mxu0 0
        %438 = vmatmul.mubr.bf16.gmra.mrb[0].mxu0 %v373
        %v439 = vpop.f32.mrb[0].mxu0
        %v440 = vadd.f32 0.0, %v439
        %v441 = vpop.f32.mrb[0].mxu0
        %v442 = vpop.f32.mrb[0].mxu0
        %v443 = vadd.f32 0.0, %v442
        %v444 = vpop.f32.mrb[0].mxu0
        %445 = vmatprep.mubr.bf16.mxu0 0
        %446 = vmatmul.mubr.bf16.gmra.mrb[0].mxu0 %v376
        %v447 = vpop.f32.mrb[0].mxu0
        %v448 = vadd.f32 0.0, %v447
        %v449 = vpop.f32.mrb[0].mxu0
        %v450 = vpop.f32.mrb[0].mxu0
        %v451 = vadd.f32 0.0, %v450
        %v452 = vpop.f32.mrb[0].mxu0
        %453 = vmatprep.mubr.bf16.mxu0 0
        %454 = vmatmul.mubr.bf16.gmra.mrb[0].mxu0 %v379
        %v455 = vpop.f32.mrb[0].mxu0
        %v456 = vadd.f32 0.0, %v455
        %v457 = vpop.f32.mrb[0].mxu0
        %v458 = vpop.f32.mrb[0].mxu0
        %v459 = vadd.f32 0.0, %v458
        %v460 = vpop.f32.mrb[0].mxu0
        %461 = vdwg.mxu0
        %468 = vrot.lane.b32.xlu0 %v440, 119
        %v469 = vpop.permute.xlu0 %468
        %470 = vrot.lane.b32.xlu0 %v443, 119
        %v471 = vpop.permute.xlu0 %470
        %472 = vrot.lane.b32.xlu0 %v448, 119
        %v473 = vpop.permute.xlu0 %472
        %474 = vrot.lane.b32.xlu0 %v451, 119
        %v475 = vpop.permute.xlu0 %474
        %476 = vrot.lane.b32.xlu0 %v456, 119
        %v477 = vpop.permute.xlu0 %476
        %478 = vrot.lane.b32.xlu0 %v459, 119
        %v479 = vpop.permute.xlu0 %478
        %v486 = vsub.f32 %v416, %v469
        %v487 = vsub.f32 %v419, %v471
        %v488 = vsub.f32 %v424, %v473
        %v489 = vsub.f32 %v427, %v475
        %v490 = vsub.f32 %v432, %v477
        %v491 = vsub.f32 %v435, %v479
        %492 = vrot.lane.b32.xlu0 %v440, 9
        %v493 = vpop.permute.xlu0 %492
        %494 = vrot.lane.b32.xlu0 %v443, 9
        %v495 = vpop.permute.xlu0 %494
        %496 = vrot.lane.b32.xlu0 %v448, 9
        %v497 = vpop.permute.xlu0 %496
        %498 = vrot.lane.b32.xlu0 %v451, 9
        %v499 = vpop.permute.xlu0 %498
        %500 = vrot.lane.b32.xlu0 %v456, 9
        %v501 = vpop.permute.xlu0 %500
        %502 = vrot.lane.b32.xlu0 %v459, 9
        %v503 = vpop.permute.xlu0 %502
        %v510 = vadd.f32 %v416, %v493
        %v511 = vadd.f32 %v419, %v495
        %v512 = vadd.f32 %v424, %v497
        %v513 = vadd.f32 %v427, %v499
        %v514 = vadd.f32 %v432, %v501
        %v515 = vadd.f32 %v435, %v503
        %v516 = vand.u32 2147483647, %v486
        %v517 = vand.u32 2147483647, %v487
        %v518 = vand.u32 2147483647, %v488
        %v519 = vand.u32 2147483647, %v489
        %v520 = vand.u32 2147483647, %v490
        %v521 = vand.u32 2147483647, %v491
        %vm522 = vcmask 72704
        %v523 = vsel %vm522, %v516, 0.0
        %v524 = vsel %vm522, %v517, 0.0
        %v525 = vadd.f32 %v523, %v524
        %v526 = vsel %vm522, %v518, 0.0
        %v527 = vadd.f32 %v525, %v526
        %v528 = vsel %vm522, %v519, 0.0
        %v529 = vadd.f32 %v527, %v528
        %v530 = vsel %vm522, %v520, 0.0
        %v531 = vadd.f32 %v529, %v530
        %v532 = vsel %vm522, %v521, 0.0
        %v533 = vadd.f32 %v531, %v532
        %534 = vadd.xlane.f32.xlu0 %v533
        %v535 = vpop.xlane.xlu0 %534
        %v536 = vrot.slane %v535, 4
        %v537 = vadd.f32 %v535, %v536
        %v538 = vrot.slane %v537, 2
        %v539 = vadd.f32 %v537, %v538
        %v540 = vrot.slane %v539, 1
        %v541 = vadd.f32 %v539, %v540
        %s542 = vtos %v541
        %s543 = sadd.f32 %s542, 0.0
        %v544 = vand.u32 2147483647, %v510
        %v545 = vand.u32 2147483647, %v511
        %v546 = vand.u32 2147483647, %v512
        %v547 = vand.u32 2147483647, %v513
        %v548 = vand.u32 2147483647, %v514
        %v549 = vand.u32 2147483647, %v515
        %556 = vrot.lane.b32.xlu0 %v544, 119
        %v557 = vpop.permute.xlu0 %556
        %558 = vrot.lane.b32.xlu0 %v545, 119
        %v559 = vpop.permute.xlu0 %558
        %560 = vrot.lane.b32.xlu0 %v546, 119
        %v561 = vpop.permute.xlu0 %560
        %562 = vrot.lane.b32.xlu0 %v547, 119
        %v563 = vpop.permute.xlu0 %562
        %564 = vrot.lane.b32.xlu0 %v548, 119
        %v565 = vpop.permute.xlu0 %564
        %566 = vrot.lane.b32.xlu0 %v549, 119
        %v567 = vpop.permute.xlu0 %566
        %v574 = vsel %vm522, %v557, 0.0
        %v575 = vsel %vm522, %v559, 0.0
        %v576 = vadd.f32 %v574, %v575
        %v577 = vsel %vm522, %v561, 0.0
        %v578 = vadd.f32 %v576, %v577
        %v579 = vsel %vm522, %v563, 0.0
        %v580 = vadd.f32 %v578, %v579
        %v581 = vsel %vm522, %v565, 0.0
        %v582 = vadd.f32 %v580, %v581
        %v583 = vsel %vm522, %v567, 0.0
        %v584 = vadd.f32 %v582, %v583
        %585 = vadd.xlane.f32.xlu0 %v584
        %v586 = vpop.xlane.xlu0 %585
        %v587 = vrot.slane %v586, 4
        %v588 = vadd.f32 %v586, %v587
        %v589 = vrot.slane %v588, 2
        %v590 = vadd.f32 %v588, %v589
        %v591 = vrot.slane %v590, 1
        %v592 = vadd.f32 %v590, %v591
        %s593 = vtos %v592
        %s594 = sadd.f32 %s543, %s593
        %v595 = vstv %s594
        %596 = vst [vmem:[%s207] sm:$0xff] %v595
        %s597 = sand.u32 %s120, 1
        %s598 = scalar_lea.sflag [#allocation3], %s597
        %s599 = sand.u32 %s120, 1
        %s600 = smul.addr %s599, 8
        %s601 = scalar_lea.vmem [#allocation2], %s600
        // Predicated region
        $region37: #{tpu_custom_call.1} parent=35 // pred_check
          %p602 = pneg %p130
        $region38: #{tpu_custom_call.1} parent=35 // pred_check_branch
          %604 = sbr.rel (%p602) target = $region40
        $region39: #{tpu_custom_call.1} parent=35 // pred_region
          %s606 = ssub.s32 128, 128
          %607 = vsyncadd %s598, %s606
          %s608 = smul.addr %s18, 128
          %s609 = scalar_lea.hbm %s4, %s608
          %s611 = sshll.u32 %s601, 4
          %s612 = int_to_ptr.vmem [resolvable:$true] %s611
          %614 = dma.vmem_to_hbm [thread:$0]  %s612, 128, %s609, %s598
        $region40: #{tpu_custom_call.1} parent=35 // pred_fallthru
          _
      $region36: #{tpu_custom_call.1} parent=5 // pred_fallthru
        _
      %p615 = scmp.le.s32.totalorder 2, %s13
      // Predicated region
      $region41: #{tpu_custom_call.1} parent=5 // pred_check
        %p616 = pneg %p615
      $region42: #{tpu_custom_call.1} parent=5 // pred_check_branch
        %618 = sbr.rel (%p616) target = $region44
      $region43: #{tpu_custom_call.1} parent=5 // pred_region
        %s619 = ssub.s32 %s13, 2
        // Predicated region
        $region45: #{tpu_custom_call.1} parent=43 // pred_check
          %p620 = pneg %p136
        $region46: #{tpu_custom_call.1} parent=43 // pred_check_branch
          %622 = sbr.rel (%p620) target = $region48
        $region47: #{tpu_custom_call.1} parent=43 // pred_region
          %s623 = sand.u32 %s121, 1
          %s624 = scalar_lea.sflag [#allocation3], %s623
          %s625 = sand.u32 %s121, 1
          %s626 = smul.addr %s625, 8
          %s627 = scalar_lea.vmem [#allocation2], %s626
          %628 = dma.done %s624, 128
        $region48: #{tpu_custom_call.1} parent=43 // pred_fallthru
          _
      $region44: #{tpu_custom_call.1} parent=5 // pred_fallthru
        _
    $region6: #{tpu_custom_call.1} parent=1 // loop_footer
      %s17 = sadd.s32 1, %s13
    $region7: #{tpu_custom_call.1} parent=1 // loop_footer_branch
      %12 = sbr.rel target = $region3
    $region8: #{tpu_custom_call.1} parent=1 // loop_exit
      _
    %629 = vsyncpa [#allocation3], 1
    %s630 = scalar_lea.sflag [#allocation3], 1
    %631 = vsyncpa %s630, 1

</llo_original>
